<compile_context>
chip_gen: v5e
topology: v5e:2x2
jax: 0.10.0
libtpu: 0.0.40
codegen_flags: <defaults>
</compile_context>

<pallas_src>
import math
from functools import partial

import jax
import jax.numpy as jnp
from jax.experimental import pallas as pl
from jax.experimental.pallas import tpu as pltpu

# ----------------------------- configuration --------------------------------
DIM_TOKENS = 128          # encoder token dim
DEPTH = 2                 # number of transformer Blocks
NUM_HEADS = 4
MLP_RATIO = 4.0
PATCH_SIZE = 4
NUM_GLOBAL_TOKENS = 1
NUM_INPUT_TOKENS = 16     # tokens kept after random masking
LN_EPS = 1e-6             # default_norm_layer eps


# ----------------------------- Pallas kernels --------------------------------
def patch_embed_kernel(patches_ref, w_ref, posb_ref, out_ref):
    """PatchedInputAdapter hot path, all modalities on one grid axis.

    patches_ref: [1, B, N, Cpp_max] (zero-padded channel-patch dim),
    w_ref: [1, Cpp_max, D] (bf16, zero-padded rows), posb_ref: [1, N, D]
    (pos embedding with the Conv2d bias folded in), out_ref: [1, B, N, D].
    Conv2d(k=stride=P) == matmul; whole batch folded onto the MXU M axis.
    """
    _, B, N, Cpp = patches_ref.shape
    D = w_ref.shape[-1]
    p = patches_ref[...].reshape(B * N, Cpp).astype(jnp.bfloat16)
    y = jnp.dot(p, w_ref[0], preferred_element_type=jnp.float32)   # [B*N, D] f32 acc
    y = y.reshape(B, N, D) + posb_ref[0]
    out_ref[0] = y.astype(out_ref.dtype)


def encoder_kernel(x_ref, ln1g_ref, ln1b_ref, wqkv_ref, bqkv_ref,
                   wproj_ref, bproj_ref, ln2g_ref, ln2b_ref,
                   w1_ref, b1_ref, w2_ref, b2_ref,
                   out_ref, tok_ref, ho_ref, *, num_heads, s_valid, layer_axis):
    """One grid step = one ViT Block (pre-LN).  Tokens stay in VMEM across layers."""
    layer = pl.program_id(layer_axis)

    B, S, D = tok_ref.shape
    hd = D // num_heads
    scale = float(hd) ** -0.5

    if s_valid < S:                                   # static (trace-time) check
        row_ids = jax.lax.broadcasted_iota(jnp.int32, (1, S, 1), 1)
        row_mask = (row_ids < s_valid).astype(jnp.float32)                 # [1,S,1]
        key_ids = jax.lax.broadcasted_iota(jnp.int32, (1, 1, S), 2)
        key_bias = jnp.where(key_ids < s_valid, 0.0, -1e30).astype(jnp.float32)
    else:
        row_mask = None
        key_bias = None

    @pl.when(layer == 0)
    def _():
        t = x_ref[...].astype(jnp.float32)
        if row_mask is not None:
            t = t * row_mask                          # keep padded rows zero
        tok_ref[...] = t

    x3 = tok_ref[...]                                 # [B, S, D] f32, VMEM-resident
    x = x3.reshape(B * S, D)                          # batch folded onto MXU M dim

    def layernorm(z, g, b):
        mu = jnp.mean(z, axis=-1, keepdims=True)
        c = z - mu
        var = jnp.mean(c * c, axis=-1, keepdims=True)
        return c * jax.lax.rsqrt(var + LN_EPS) * g + b

    # ---- attention: x + Wproj(concat_h softmax(q_h k_h^T) v_h) + b ----
    xn = layernorm(x, ln1g_ref[0], ln1b_ref[0])                            # f32
    qkv = jnp.dot(xn.astype(jnp.bfloat16), wqkv_ref[0],
                  preferred_element_type=jnp.float32) + bqkv_ref[0]        # [B*S, 3D] f32
    qkv = qkv.reshape(B, S, 3 * D)

    # lane-aligned (128-multiple) component slices, hoisted out of the head loop;
    # q scaled once in f32, then cast to bf16 MXU operands.
    q_all = (qkv[:, :, :D] * scale).astype(jnp.bfloat16)
    k_all = qkv[:, :, D:2 * D].astype(jnp.bfloat16)
    v_all = qkv[:, :, 2 * D:3 * D].astype(jnp.bfloat16)

    # TODO(synk): a fully head-batched 'bhqd,bhkd->bhqk' einsum would pack the
    # EUP/XLU slots better but needs 4-D/5-D relayouts with hd=32 lanes; the
    # unrolled H=4 loop below is the conservative, guaranteed-to-lower form.
    for h in range(num_heads):
        sl = slice(h * hd, (h + 1) * hd)
        att = jnp.einsum('bqd,bkd->bqk', q_all[:, :, sl], k_all[:, :, sl],
                         preferred_element_type=jnp.float32)               # [B,S,S] f32
        if key_bias is not None:
            att = att + key_bias
        att = att - jnp.max(att, axis=-1, keepdims=True)
        att = jnp.exp(att)
        # EUP reciprocal instead of VALU division (tiny approximation).
        att = att * pl.reciprocal(jnp.sum(att, axis=-1, keepdims=True), approx=True)
        ho = jnp.einsum('bqk,bkd->bqd', att.astype(jnp.bfloat16), v_all[:, :, sl],
                        preferred_element_type=jnp.float32)                # [B,S,hd] f32
        ho_ref[:, :, sl] = ho                       # lane-offset masked store (head concat)

    # single fused head-concat + output projection: one K=128 bf16 MXU pass
    proj = jnp.dot(ho_ref[...].reshape(B * S, D).astype(jnp.bfloat16), wproj_ref[0],
                   preferred_element_type=jnp.float32) + bproj_ref[0]
    x = x + proj

    # ---- MLP: x + W2(gelu(W1 LN(x) + b1)) + b2 ----
    yn = layernorm(x, ln2g_ref[0], ln2b_ref[0])
    h1 = jnp.dot(yn.astype(jnp.bfloat16), w1_ref[0],
                 preferred_element_type=jnp.float32) + b1_ref[0]
    # TODO(synk): torch nn.GELU is exact erf-GELU; tanh approximation used for robust TPU lowering.
    h1 = jax.nn.gelu(h1, approximate=True)
    h2 = jnp.dot(h1.astype(jnp.bfloat16), w2_ref[0],
                 preferred_element_type=jnp.float32) + b2_ref[0]
    x = x + h2

    x3 = x.reshape(B, S, D)
    if row_mask is not None:
        x3 = x3 * row_mask                           # keep padded rows zero across layers
    tok_ref[...] = x3                                # stays in VMEM for the next layer
    out_ref[0] = x3.astype(out_ref.dtype)            # per-layer output (module contract)


# ----------------------------- Pallas wrappers --------------------------------
def patch_embed_all(patches_stack, w_stack, posb_stack):
    """Single pallas_call for all modalities (modality on a grid axis)."""
    M, B, N, Cpp = patches_stack.shape
    D = w_stack.shape[-1]
    return pl.pallas_call(
        patch_embed_kernel,
        out_shape=jax.ShapeDtypeStruct((M, B, N, D), jnp.float32),
        grid=(M,),
        in_specs=[
            pl.BlockSpec((1, B, N, Cpp), lambda m: (m, 0, 0, 0)),
            pl.BlockSpec((1, Cpp, D), lambda m: (m, 0, 0)),
            pl.BlockSpec((1, N, D), lambda m: (m, 0, 0)),
        ],
        out_specs=pl.BlockSpec((1, B, N, D), lambda m: (m, 0, 0, 0)),
        compiler_params=pltpu.CompilerParams(dimension_semantics=("parallel",)),
    )(patches_stack, w_stack, posb_stack)


def encoder_forward(tokens, layer_params_list, num_heads, s_valid, batch_parallel=False):
    """Fused encoder: all Blocks in one pallas_call, tokens resident in VMEM.

    batch_parallel=True adds a leading "parallel" batch grid axis (v7x megacore).
    """
    L = len(layer_params_list)
    B, S_pad, D = tokens.shape

    mm_keys = {"wqkv", "wproj", "w1", "w2"}           # MXU operands -> bf16 (halves DMA)
    stacked = {}
    for k in layer_params_list[0]:
        arr = jnp.stack([lp[k] for lp in layer_params_list], axis=0)
        stacked[k] = arr.astype(jnp.bfloat16) if k in mm_keys else arr
    Dh = stacked["w1"].shape[2]

    if batch_parallel:
        grid = (B, L)
        layer_axis = 1
        Bb = 1
        dims = ("parallel", "arbitrary")              # batch sharded across TCs (v7x)

        def wmap(nd):
            return lambda b, l, _nd=nd: (l,) + (0,) * _nd

        tok_spec = pl.BlockSpec((1, S_pad, D), lambda b, l: (b, 0, 0))
        out_spec = pl.BlockSpec((1, 1, S_pad, D), lambda b, l: (l, b, 0, 0))
    else:
        grid = (L,)
        layer_axis = 0
        Bb = B
        dims = ("arbitrary",)                         # layers are sequential

        def wmap(nd):
            return lambda l, _nd=nd: (l,) + (0,) * _nd

        tok_spec = pl.BlockSpec((B, S_pad, D), lambda l: (0, 0, 0))
        out_spec = pl.BlockSpec((1, B, S_pad, D), lambda l: (l, 0, 0, 0))

    def wspec(*shape_dims):
        return pl.BlockSpec((1,) + shape_dims, wmap(len(shape_dims)))

    return pl.pallas_call(
        partial(encoder_kernel, num_heads=num_heads, s_valid=s_valid,
                layer_axis=layer_axis),
        out_shape=jax.ShapeDtypeStruct((L, B, S_pad, D), jnp.float32),
        grid=grid,
        in_specs=[
            tok_spec,                                           # tokens (read at layer 0)
            wspec(1, D), wspec(1, D),                           # ln1 gamma / beta
            wspec(D, 3 * D), wspec(1, 3 * D),                   # Wqkv / bqkv
            wspec(D, D), wspec(1, D),                           # Wproj / bproj
            wspec(1, D), wspec(1, D),                           # ln2 gamma / beta
            wspec(D, Dh), wspec(1, Dh),                         # W1 / b1
            wspec(Dh, D), wspec(1, D),                          # W2 / b2
        ],
        out_specs=out_spec,
        scratch_shapes=[pltpu.VMEM((Bb, S_pad, D), jnp.float32),   # resident tokens
                        pltpu.VMEM((Bb, S_pad, D), jnp.float32)],  # head-concat buffer
        compiler_params=pltpu.CompilerParams(
            dimension_semantics=dims,
            vmem_limit_bytes=64 * 1024 * 1024),
    )(tokens, stacked["ln1g"], stacked["ln1b"], stacked["wqkv"], stacked["bqkv"],
      stacked["wproj"], stacked["bproj"], stacked["ln2g"], stacked["ln2b"],
      stacked["w1"], stacked["b1"], stacked["w2"], stacked["b2"])


def _use_batch_parallel_grid():
    """Only v7x has 2 TensorCores per chip; gate the batch grid axis on it."""
    try:
        kind = jax.devices()[0].device_kind.lower()
    except Exception:
        return False
    return "v7" in kind


# ----------------------------- params / glue --------------------------------
def build_2d_sincos_posemb(h, w, embed_dim):
    grid_h = jnp.arange(h, dtype=jnp.float32)
    grid_w = jnp.arange(w, dtype=jnp.float32)
    gh, gw = jnp.meshgrid(grid_h, grid_w, indexing="ij")
    pos_dim = embed_dim // 4
    omega = jnp.arange(pos_dim, dtype=jnp.float32) / pos_dim
    omega = 1.0 / (10000.0 ** omega)
    out_h = gh.reshape(-1)[:, None] * omega[None, :]
    out_w = gw.reshape(-1)[:, None] * omega[None, :]
    return jnp.concatenate(
        [jnp.sin(out_w), jnp.cos(out_w), jnp.sin(out_h), jnp.cos(out_h)], axis=1
    )  # [h*w, D]


def xavier_uniform(key, shape, fan_in, fan_out):
    lim = math.sqrt(6.0 / (fan_in + fan_out))
    return jax.random.uniform(key, shape, jnp.float32, -lim, lim)


def init_params(key, domain_channels, image_hw, patch_size, dim, depth, mlp_ratio, num_global):
    H, W = image_hw
    nh, nw = H // patch_size, W // patch_size
    params = {"input_adapters": {}, "layers": []}
    key, gk = jax.random.split(key)
    params["global_tokens"] = 0.02 * jax.random.normal(gk, (1, num_global, dim), jnp.float32)
    for domain, C in domain_channels.items():
        key, wk = jax.random.split(key)
        cpp = C * patch_size * patch_size
        params["input_adapters"][domain] = {
            "w": xavier_uniform(wk, (cpp, dim), cpp, dim),
            "b": jnp.zeros((1, dim), jnp.float32),
            "pos": build_2d_sincos_posemb(nh, nw, dim),
        }
    hidden = int(dim * mlp_ratio)
    for _ in range(depth):
        key, k0, k1, k2, k3 = jax.random.split(key, 5)
        params["layers"].append(dict(
            ln1g=jnp.ones((1, dim), jnp.float32), ln1b=jnp.zeros((1, dim), jnp.float32),
            wqkv=xavier_uniform(k0, (dim, 3 * dim), dim, dim),
            bqkv=jnp.zeros((1, 3 * dim), jnp.float32),
            wproj=xavier_uniform(k1, (dim, dim), dim, dim),
            bproj=jnp.zeros((1, dim), jnp.float32),
            ln2g=jnp.ones((1, dim), jnp.float32), ln2b=jnp.zeros((1, dim), jnp.float32),
            w1=xavier_uniform(k2, (dim, hidden), dim, hidden),
            b1=jnp.zeros((1, hidden), jnp.float32),
            w2=xavier_uniform(k3, (hidden, dim), hidden, dim),
            b2=jnp.zeros((1, dim), jnp.float32),
        ))
    return params


def extract_patches(img_nchw, patch_size):
    """NCHW -> [B, N, C*P*P] in (c, ph, pw) flatten order (matches Conv2d weight.reshape)."""
    B, C, H, W = img_nchw.shape
    nh, nw = H // patch_size, W // patch_size
    x = img_nchw.reshape(B, C, nh, patch_size, nw, patch_size)
    x = jnp.transpose(x, (0, 2, 4, 1, 3, 5))
    return x.reshape(B, nh * nw, C * patch_size * patch_size)


def _pad_last(a, target):
    pad = target - a.shape[-1]
    if pad > 0:
        a = jnp.pad(a, [(0, 0)] * (a.ndim - 1) + [(0, pad)])
    return a


def _pad_rows(w, target):
    pad = target - w.shape[0]
    if pad > 0:
        w = jnp.pad(w, ((0, pad), (0, 0)))
    return w


def generate_random_masks(key, input_task_tokens, num_input_tokens, alphas=0.5):
    """JAX port of MultiMAE.generate_random_masks (Dirichlet task sampling + random masking)."""
    # TODO(synk): Dirichlet sampling + argsort-based shuffling is data-dependent sorting; kept in plain JAX.
    tokens = list(input_task_tokens.values())
    names = list(input_task_tokens.keys())
    B = tokens[0].shape[0]
    n_tasks = len(tokens)
    kd, kn, ks = jax.random.split(key, 3)
    alpha_vec = jnp.full((n_tasks,), alphas, dtype=jnp.float32)
    task_sampling_dist = jax.random.dirichlet(kd, alpha_vec, shape=(B,))
    samples_per_task = jnp.round(task_sampling_dist * num_input_tokens).astype(jnp.int32)

    task_masks = []
    num_tokens_per_task = [t.shape[1] for t in tokens]
    noise_keys = jax.random.split(kn, n_tasks)
    for i, num_tokens in enumerate(num_tokens_per_task):
        noise = jax.random.uniform(noise_keys[i], (B, num_tokens))
        ids_arange_shuffle = jnp.argsort(noise, axis=1)
        mask = jnp.broadcast_to(jnp.arange(num_tokens)[None, :], (B, num_tokens))
        mask = jnp.take_along_axis(mask, ids_arange_shuffle, axis=1)
        mask = jnp.where(mask < samples_per_task[:, i:i + 1], 0, 1)
        task_masks.append(mask)

    mask_all = jnp.concatenate(task_masks, axis=1)
    ids_shuffle = jnp.argsort(mask_all.astype(jnp.float32)
                              + jax.random.uniform(ks, mask_all.shape), axis=1)
    ids_restore = jnp.argsort(ids_shuffle, axis=1)
    ids_keep = ids_shuffle[:, :num_input_tokens]
    mask_all = jnp.ones_like(mask_all)
    mask_all = mask_all.at[:, :num_input_tokens].set(0)
    mask_all = jnp.take_along_axis(mask_all, ids_restore, axis=1)

    out_masks, start = {}, 0
    for name, n in zip(names, num_tokens_per_task):
        out_masks[name] = mask_all[:, start:start + n]
        start += n
    return out_masks, ids_keep, ids_restore


def multimae_forward(x_dict, params, key, mask_inputs=True,
                     num_input_tokens=NUM_INPUT_TOKENS, alphas=0.5):
    """MultiMAE.forward with output_adapters=None -> returns (outputs, task_masks)."""
    B = next(iter(x_dict.values())).shape[0]
    domains = list(x_dict.keys())

    # ---- input adapters: ONE Pallas call for all modalities (modality grid axis) ----
    # Channel-patch dims are zero-padded to a common width; Conv2d bias is folded
    # into the positional embedding host-side.  (All modalities share N here.)
    patches_list = [extract_patches(x_dict[d], PATCH_SIZE) for d in domains]
    cpp_max = max(p.shape[-1] for p in patches_list)
    patches_stack = jnp.stack([_pad_last(p, cpp_max) for p in patches_list], axis=0)
    w_stack = jnp.stack(
        [_pad_rows(params["input_adapters"][d]["w"], cpp_max) for d in domains], axis=0
    ).astype(jnp.bfloat16)
    posb_stack = jnp.stack(
        [params["input_adapters"][d]["pos"] + params["input_adapters"][d]["b"]
         for d in domains], axis=0)
    embeds = patch_embed_all(patches_stack, w_stack, posb_stack)   # [M, B, N, D]
    input_task_tokens = {d: embeds[i] for i, d in enumerate(domains)}

    if not mask_inputs:
        num_input_tokens = sum(t.shape[1] for t in input_task_tokens.values())

    # ---- random masking (plain JAX: Dirichlet / argsort / gather) ----
    task_masks, ids_keep, ids_restore = generate_random_masks(
        key, input_task_tokens, num_input_tokens, alphas=alphas)

    # ---- token selection + global tokens ----
    input_tokens = jnp.concatenate(list(input_task_tokens.values()), axis=1)   # [B, N_all, D]
    input_tokens = jnp.take_along_axis(input_tokens, ids_keep[:, :, None], axis=1)
    global_tokens = jnp.broadcast_to(params["global_tokens"],
                                     (B, NUM_GLOBAL_TOKENS, DIM_TOKENS))
    encoder_tokens = jnp.concatenate([input_tokens, global_tokens], axis=1)    # [B, S, D]

    # ---- pad sequence to a sublane multiple for clean (8,128) tiling ----
    S = encoder_tokens.shape[1]
    S_pad = ((S + 7) // 8) * 8
    if S_pad != S:
        encoder_tokens = jnp.pad(encoder_tokens, ((0, 0), (0, S_pad - S), (0, 0)))

    # ---- fused transformer encoder (single Pallas call, all Blocks) ----
    layer_outs = encoder_forward(encoder_tokens, params["layers"], NUM_HEADS,
                                 s_valid=S, batch_parallel=_use_batch_parallel_grid())
    outputs = [layer_outs[i, :, :S, :] for i in range(len(params["layers"]))]

    # output_adapters is None -> return per-layer outputs and task masks.
    return outputs, task_masks


# ----------------------------- main --------------------------------
if __name__ == "__main__":
    root = jax.random.PRNGKey(0)
    k_rgb, k_dep, k_param, k_mask = jax.random.split(root, 4)

    # Two input modalities (NCHW, like PyTorch): rgb-like 4ch and depth-like 1ch.
    x_dict = {
        "rgb": jax.random.normal(k_rgb, (2, 4, 16, 16), jnp.float32),
        "depth": jax.random.normal(k_dep, (2, 1, 16, 16), jnp.float32),
    }

    params = init_params(
        k_param,
        domain_channels={"rgb": 4, "depth": 1},
        image_hw=(16, 16),
        patch_size=PATCH_SIZE,
        dim=DIM_TOKENS,
        depth=DEPTH,
        mlp_ratio=MLP_RATIO,
        num_global=NUM_GLOBAL_TOKENS,
    )

    outputs, task_masks = multimae_forward(x_dict, params, k_mask,
                                           mask_inputs=True,
                                           num_input_tokens=NUM_INPUT_TOKENS,
                                           alphas=0.5)
    jax.block_until_ready(outputs)
    jax.block_until_ready(task_masks)

    # light sanity checks
    S = NUM_INPUT_TOKENS + NUM_GLOBAL_TOKENS
    assert len(outputs) == DEPTH
    assert outputs[-1].shape == (2, S, DIM_TOKENS)
    assert task_masks["rgb"].shape == (2, 16) and task_masks["depth"].shape == (2, 16)
    assert all(bool(jnp.all(jnp.isfinite(o))) for o in outputs)

    print("KERNEL_OK")
</pallas_src>

<mosaic_0001>
module attributes {stable_mosaic.version = 11 : i64} {
  func.func @patch_embed_kernel(%arg0: i32, %arg1: memref<1x2x16x64xf32, #tpu.memory_space<vmem>>, %arg2: memref<1x64x128xbf16, #tpu.memory_space<vmem>>, %arg3: memref<1x16x128xf32, #tpu.memory_space<vmem>>, %arg4: memref<1x2x16x128xf32, #tpu.memory_space<vmem>>) attributes {dimension_semantics = [#tpu.dimension_semantics<parallel>], iteration_bounds = array<i64: 2>, scalar_prefetch = 0 : i64, scratch_operands = 0 : i64, tpu.core_type = #tpu.core_type<tc>, window_params = [{transform_indices = @transform_0, window_bounds = array<i64: 1, 2, 16, 64>}, {transform_indices = @transform_1, window_bounds = array<i64: 1, 64, 128>}, {transform_indices = @transform_2, window_bounds = array<i64: 1, 16, 128>}, {transform_indices = @transform_3, window_bounds = array<i64: 1, 2, 16, 128>}]} {
    %c0 = arith.constant 0 : index
    %c0_0 = arith.constant 0 : index
    %c0_1 = arith.constant 0 : index
    %c0_2 = arith.constant 0 : index
    %0 = vector.load %arg1[%c0, %c0_0, %c0_1, %c0_2] : memref<1x2x16x64xf32, #tpu.memory_space<vmem>>, vector<1x2x16x64xf32>
    %1 = vector.shape_cast %0 : vector<1x2x16x64xf32> to vector<32x64xf32>
    %2 = arith.truncf %1 : vector<32x64xf32> to vector<32x64xbf16>
    %c0_3 = arith.constant 0 : index
    %c0_4 = arith.constant 0 : index
    %c0_5 = arith.constant 0 : index
    %3 = vector.load %arg2[%c0_3, %c0_4, %c0_5] : memref<1x64x128xbf16, #tpu.memory_space<vmem>>, vector<1x64x128xbf16>
    %4 = vector.shape_cast %3 : vector<1x64x128xbf16> to vector<64x128xbf16>
    %cst = arith.constant dense<0.000000e+00> : vector<32x128xf32>
    %5 = tpu.matmul %2, %4, %cst {dimension_numbers = #tpu.dot_dimension_numbers<[1], [0], [0], [1], [0, 0, 1, 1], [], []>} : vector<32x64xbf16>, vector<64x128xbf16>, vector<32x128xf32> -> vector<32x128xf32>
    %6 = vector.shape_cast %5 : vector<32x128xf32> to vector<2x16x128xf32>
    %c0_6 = arith.constant 0 : index
    %c0_7 = arith.constant 0 : index
    %c0_8 = arith.constant 0 : index
    %7 = vector.load %arg3[%c0_6, %c0_7, %c0_8] : memref<1x16x128xf32, #tpu.memory_space<vmem>>, vector<1x16x128xf32>
    %8 = vector.shape_cast %7 : vector<1x16x128xf32> to vector<16x128xf32>
    %9 = vector.shape_cast %8 : vector<16x128xf32> to vector<1x16x128xf32>
    %10 = vector.broadcast %9 : vector<1x16x128xf32> to vector<2x16x128xf32>
    %11 = arith.addf %6, %10 : vector<2x16x128xf32>
    %c0_9 = arith.constant 0 : index
    %c0_10 = arith.constant 0 : index
    %c0_11 = arith.constant 0 : index
    %c0_12 = arith.constant 0 : index
    %12 = vector.load %arg4[%c0_9, %c0_10, %c0_11, %c0_12] : memref<1x2x16x128xf32, #tpu.memory_space<vmem>>, vector<1x2x16x128xf32>
    %13 = vector.shape_cast %12 : vector<1x2x16x128xf32> to vector<2x16x128xf32>
    %14 = vector.shape_cast %11 : vector<2x16x128xf32> to vector<1x2x16x128xf32>
    tpu.vector_store %arg4[%c0_9, %c0_10, %c0_11, %c0_12], %14 {strides = array<i32>} : memref<1x2x16x128xf32, #tpu.memory_space<vmem>>, vector<1x2x16x128xf32>,
    return
  }
  func.func @transform_0(%arg0: i32) -> (i32, i32, i32, i32) {
    %c0_i32 = arith.constant 0 : i32
    %c0_i32_0 = arith.constant 0 : i32
    %c0_i32_1 = arith.constant 0 : i32
    %c0_i32_2 = arith.constant 0 : i32
    return %arg0, %c0_i32, %c0_i32_0, %c0_i32_1 : i32, i32, i32, i32
  }
  func.func @transform_1(%arg0: i32) -> (i32, i32, i32) {
    %c0_i32 = arith.constant 0 : i32
    %c0_i32_0 = arith.constant 0 : i32
    %c0_i32_1 = arith.constant 0 : i32
    return %arg0, %c0_i32, %c0_i32_0 : i32, i32, i32
  }
  func.func @transform_2(%arg0: i32) -> (i32, i32, i32) {
    %c0_i32 = arith.constant 0 : i32
    %c0_i32_0 = arith.constant 0 : i32
    %c0_i32_1 = arith.constant 0 : i32
    return %arg0, %c0_i32, %c0_i32_0 : i32, i32, i32
  }
  func.func @transform_3(%arg0: i32) -> (i32, i32, i32, i32) {
    %c0_i32 = arith.constant 0 : i32
    %c0_i32_0 = arith.constant 0 : i32
    %c0_i32_1 = arith.constant 0 : i32
    %c0_i32_2 = arith.constant 0 : i32
    return %arg0, %c0_i32, %c0_i32_0, %c0_i32_1 : i32, i32, i32, i32
  }
}

</mosaic_0001>

<llo_original>
// kernel: tpu_custom_call.1
$region0: #{tpu_custom_call.1}
  #allocation0 [shape = 'u32[]', space=smem, size = 0x4, offset = 0x4, fixed_abs, tag = 'smem constant byte address 0x4 - core index']
  #allocation1 [shape = 'u32[72,128]{1,0:T(1,128)}', space=vmem, size = 0x9000, scoped, tag = 'internal scratch']
  %s0 = inlined_call_operand.hbm [shape: f32[2,2,16,64], index: 0, kind: input, shape index: {}]
  %s1 = inlined_call_operand.hbm [shape: bf16[2,64,128], index: 1, kind: input, shape index: {}]
  %s2 = inlined_call_operand.hbm [shape: f32[2,16,128], index: 2, kind: input, shape index: {}]
  %s3 = inlined_call_operand.hbm [shape: f32[2,2,16,128], index: 3, kind: output, shape index: {}]
  %s4 = sld [smem:[#allocation0]]
  $region57: #{tpu_custom_call.1} parent=0
    _
  %s6 = ssub.s32 1, %s4
  %s7 = scalar_select 0, %s6, %s4
  $region1: #{tpu_custom_call.1} parent=0
    #allocation2 [shape = 'u8[32768]{0}', space=vmem, size = 0x8000, scoped, tag = 'input window, operand 0']
    #allocation3 [shape = 's32[2]{0}', space=sflag, size = 0x8, scoped, tag = 'scoped memory for tpu_custom_call.1']
    #allocation4 [shape = 's32[2]{0}', space=sflag, size = 0x8, scoped, tag = 'scoped memory for tpu_custom_call.1']
    #allocation5 [shape = 'u8[32768]{0}', space=vmem, size = 0x8000, scoped, tag = 'input window, operand 1']
    #allocation6 [shape = 's32[2]{0}', space=sflag, size = 0x8, scoped, tag = 'scoped memory for tpu_custom_call.1']
    #allocation7 [shape = 'u8[16384]{0}', space=vmem, size = 0x4000, scoped, tag = 'input window, operand 2']
    #allocation8 [shape = 'u8[32768]{0}', space=vmem, size = 0x8000, scoped, tag = 'output window, operand 0']
    %8 = vsyncpa [#allocation3], 0
    %s9 = scalar_lea.sflag [#allocation3], 1
    %10 = vsyncpa %s9, 0
    %11 = vsyncpa [#allocation6], 0
    %s12 = scalar_lea.sflag [#allocation6], 1
    %13 = vsyncpa %s12, 0
    %14 = vsyncpa [#allocation4], 0
    %s15 = scalar_lea.sflag [#allocation4], 1
    %16 = vsyncpa %s15, 0
    loop: start=0, step=1, limit=4
    $region2: #{tpu_custom_call.1} parent=1 // loop_pre_header
      _
    $region3: #{tpu_custom_call.1} parent=1 // loop_header
      %s18 = sphi 0, %s22
      %p19 = scmp.ge.s32.totalorder %s18, 4
      %s28 = sphi 0, %s30
      %s31 = sphi 0, %s28
      %s32 = sphi 0, %s31
      %s48 = sphi 0, %s32
      %s54 = sphi 0, %s56
      %s57 = sphi 0, %s54
      %s58 = sphi 0, %s57
      %s74 = sphi 0, %s58
      %s80 = sphi 0, %s82
      %s83 = sphi 0, %s80
      %s84 = sphi 0, %s83
      %s100 = sphi 0, %s84
      %s106 = sphi 0, %s108
      %s109 = sphi 0, %s106
      %s110 = sphi 0, %s109
      %s126 = sphi 0, %s110
    $region4: #{tpu_custom_call.1} parent=1 // loop_header_branch
      %21 = sbr.rel (%p19) target = $region8
    $region5: #{tpu_custom_call.1} parent=1 // loop_body
      %s23 = ssub.s32 %s18, 1
      %s24 = ssub.s32 %s18, 2
      %s25 = sadd.s32 %s18, 1
      %s26 = ssub.s32 %s18, %s25
      %p27 = scmp.eq.s32.totalorder %s26, 0
      %s29 = sadd.s32 %s28, 1
      %s30 = scalar_select %p27, %s28, %s29
      %p33 = pneg %p27
      %p34 = scmp.eq.s32.totalorder %s18, 1
      %p35 = por %p33, %p34
      %p36 = scmp.ne.s32.totalorder %s28, %s31
      %p37 = scmp.eq.s32.totalorder %s18, 0
      %p38 = por %p36, %p37
      %p39 = scmp.ne.s32.totalorder %s28, %s31
      %p40 = scmp.eq.s32.totalorder %s23, 1
      %p41 = por %p39, %p40
      %p42 = scmp.ne.s32.totalorder %s31, %s32
      %p43 = scmp.eq.s32.totalorder %s23, 0
      %p44 = por %p42, %p43
      %p45 = scmp.ne.s32.totalorder %s31, %s32
      %p46 = scmp.eq.s32.totalorder %s24, 1
      %p47 = por %p45, %p46
      %p49 = scmp.ne.s32.totalorder %s32, %s48
      %p50 = scmp.eq.s32.totalorder %s24, 0
      %p51 = por %p49, %p50
      %s52 = ssub.s32 %s18, %s25
      %p53 = scmp.eq.s32.totalorder %s52, 0
      %s55 = sadd.s32 %s54, 1
      %s56 = scalar_select %p53, %s54, %s55
      %p59 = pneg %p53
      %p60 = scmp.eq.s32.totalorder %s18, 1
      %p61 = por %p59, %p60
      %p62 = scmp.ne.s32.totalorder %s54, %s57
      %p63 = scmp.eq.s32.totalorder %s18, 0
      %p64 = por %p62, %p63
      %p65 = scmp.ne.s32.totalorder %s54, %s57
      %p66 = scmp.eq.s32.totalorder %s23, 1
      %p67 = por %p65, %p66
      %p68 = scmp.ne.s32.totalorder %s57, %s58
      %p69 = scmp.eq.s32.totalorder %s23, 0
      %p70 = por %p68, %p69
      %p71 = scmp.ne.s32.totalorder %s57, %s58
      %p72 = scmp.eq.s32.totalorder %s24, 1
      %p73 = por %p71, %p72
      %p75 = scmp.ne.s32.totalorder %s58, %s74
      %p76 = scmp.eq.s32.totalorder %s24, 0
      %p77 = por %p75, %p76
      %s78 = ssub.s32 %s18, %s25
      %p79 = scmp.eq.s32.totalorder %s78, 0
      %s81 = sadd.s32 %s80, 1
      %s82 = scalar_select %p79, %s80, %s81
      %p85 = pneg %p79
      %p86 = scmp.eq.s32.totalorder %s18, 1
      %p87 = por %p85, %p86
      %p88 = scmp.ne.s32.totalorder %s80, %s83
      %p89 = scmp.eq.s32.totalorder %s18, 0
      %p90 = por %p88, %p89
      %p91 = scmp.ne.s32.totalorder %s80, %s83
      %p92 = scmp.eq.s32.totalorder %s23, 1
      %p93 = por %p91, %p92
      %p94 = scmp.ne.s32.totalorder %s83, %s84
      %p95 = scmp.eq.s32.totalorder %s23, 0
      %p96 = por %p94, %p95
      %p97 = scmp.ne.s32.totalorder %s83, %s84
      %p98 = scmp.eq.s32.totalorder %s24, 1
      %p99 = por %p97, %p98
      %p101 = scmp.ne.s32.totalorder %s84, %s100
      %p102 = scmp.eq.s32.totalorder %s24, 0
      %p103 = por %p101, %p102
      %s104 = ssub.s32 %s18, %s25
      %p105 = scmp.eq.s32.totalorder %s104, 0
      %s107 = sadd.s32 %s106, 1
      %s108 = scalar_select %p105, %s106, %s107
      %p111 = pneg %p105
      %p112 = scmp.eq.s32.totalorder %s18, 1
      %p113 = por %p111, %p112
      %p114 = scmp.ne.s32.totalorder %s106, %s109
      %p115 = scmp.eq.s32.totalorder %s18, 0
      %p116 = por %p114, %p115
      %p117 = scmp.ne.s32.totalorder %s106, %s109
      %p118 = scmp.eq.s32.totalorder %s23, 1
      %p119 = por %p117, %p118
      %p120 = scmp.ne.s32.totalorder %s109, %s110
      %p121 = scmp.eq.s32.totalorder %s23, 0
      %p122 = por %p120, %p121
      %p123 = scmp.ne.s32.totalorder %s109, %s110
      %p124 = scmp.eq.s32.totalorder %s24, 1
      %p125 = por %p123, %p124
      %p127 = scmp.ne.s32.totalorder %s110, %s126
      %p128 = scmp.eq.s32.totalorder %s24, 0
      %p129 = por %p127, %p128
      %p130 = scmp.le.s32.totalorder 1, %s18
      %p131 = scmp.lt.s32.totalorder %s18, 3
      %p132 = pnand %p130, %p131
      %p133 = pneg %p132
      // Predicated region
      $region9: #{tpu_custom_call.1} parent=5 // pred_check
        _
      $region10: #{tpu_custom_call.1} parent=5 // pred_check_branch
        %135 = sbr.rel (%p132) target = $region12
      $region11: #{tpu_custom_call.1} parent=5 // pred_region
        %s136 = ssub.s32 %s18, 1
      $region12: #{tpu_custom_call.1} parent=5 // pred_fallthru
        _
      %p137 = scmp.lt.s32.totalorder %s18, 2
      // Predicated region
      $region13: #{tpu_custom_call.1} parent=5 // pred_check
        %p138 = pneg %p137
      $region14: #{tpu_custom_call.1} parent=5 // pred_check_branch
        %140 = sbr.rel (%p138) target = $region16
      $region15: #{tpu_custom_call.1} parent=5 // pred_region
        // Predicated region
        $region17: #{tpu_custom_call.1} parent=15 // pred_check
          %p141 = pneg %p38
        $region18: #{tpu_custom_call.1} parent=15 // pred_check_branch
          %143 = sbr.rel (%p141) target = $region20
        $region19: #{tpu_custom_call.1} parent=15 // pred_region
          %s144 = sand.u32 %s28, 1
          %s145 = scalar_lea.sflag [#allocation3], %s144
          %s146 = sand.u32 %s28, 1
          %s147 = smul.addr %s146, 32
          %s148 = scalar_lea.vmem [#allocation2], %s147
          %150 = vsyncadd %s145, 0
          %s151 = smul.addr %s18, 4
          %s152 = smul.addr %s151, 8
          %s153 = scalar_lea.hbm %s0, %s152
          %s154 = sshll.u32 %s153, 4
          %s155 = int_to_ptr.hbm [resolvable:$true] %s154
          %s156 = sshll.u32 %s148, 4
          %s157 = int_to_ptr.vmem [resolvable:$true] %s156
          %162 = dma.hbm_to_vmem [thread:$0]  %s155, 512, %s157, %s145, 128, 128, 8
        $region20: #{tpu_custom_call.1} parent=15 // pred_fallthru
          _
        // Predicated region
        $region21: #{tpu_custom_call.1} parent=15 // pred_check
          %p163 = pneg %p64
        $region22: #{tpu_custom_call.1} parent=15 // pred_check_branch
          %165 = sbr.rel (%p163) target = $region24
        $region23: #{tpu_custom_call.1} parent=15 // pred_region
          %s166 = sand.u32 %s18, 1
          %s167 = scalar_lea.sflag [#allocation6], %s166
          %s168 = sand.u32 %s54, 1
          %s169 = smul.addr %s168, 32
          %s170 = scalar_lea.vmem [#allocation5], %s169
          %172 = vsyncadd %s167, 0
          %s173 = smul.addr %s18, 8
          %s174 = smul.addr %s173, 4
          %s175 = scalar_lea.hbm %s1, %s174
          %s176 = sshll.u32 %s175, 4
          %s177 = int_to_ptr.hbm [resolvable:$true] %s176
          %s178 = sshll.u32 %s170, 4
          %s179 = int_to_ptr.vmem [resolvable:$true] %s178
          %184 = dma.hbm_to_vmem [thread:$0]  %s177, 512, %s179, %s167, 64, 64, 4
        $region24: #{tpu_custom_call.1} parent=15 // pred_fallthru
          _
        // Predicated region
        $region25: #{tpu_custom_call.1} parent=15 // pred_check
          %p185 = pneg %p90
        $region26: #{tpu_custom_call.1} parent=15 // pred_check_branch
          %187 = sbr.rel (%p185) target = $region28
        $region27: #{tpu_custom_call.1} parent=15 // pred_region
          %s188 = sand.u32 %s18, 1
          %s189 = scalar_lea.sflag [#allocation6], %s188
          %s190 = sand.u32 %s80, 1
          %s191 = smul.addr %s190, 16
          %s192 = scalar_lea.vmem [#allocation7], %s191
          %194 = vsyncadd %s189, 0
          %s195 = smul.addr %s18, 2
          %s196 = smul.addr %s195, 8
          %s197 = scalar_lea.hbm %s2, %s196
          %s198 = sshll.u32 %s197, 4
          %s199 = int_to_ptr.hbm [resolvable:$true] %s198
          %s200 = sshll.u32 %s192, 4
          %s201 = int_to_ptr.vmem [resolvable:$true] %s200
          %206 = dma.hbm_to_vmem [thread:$0]  %s199, 256, %s201, %s189, 128, 128, 8
        $region28: #{tpu_custom_call.1} parent=15 // pred_fallthru
          _
      $region16: #{tpu_custom_call.1} parent=5 // pred_fallthru
        _
      %p207 = scmp.le.s32.totalorder 1, %s18
      %p208 = scmp.lt.s32.totalorder %s18, 3
      %p209 = pnand %p207, %p208
      %p210 = pneg %p209
      // Predicated region
      $region29: #{tpu_custom_call.1} parent=5 // pred_check
        _
      $region30: #{tpu_custom_call.1} parent=5 // pred_check_branch
        %212 = sbr.rel (%p209) target = $region32
      $region31: #{tpu_custom_call.1} parent=5 // pred_region
        %s213 = ssub.s32 %s18, 1
        %s214 = sand.u32 %s31, 1
        %s215 = scalar_lea.sflag [#allocation3], %s214
        %s216 = sand.u32 %s31, 1
        %s217 = smul.addr %s216, 32
        %s218 = scalar_lea.vmem [#allocation2], %s217
        // Predicated region
        $region33: #{tpu_custom_call.1} parent=31 // pred_check
          %p219 = pneg %p44
        $region34: #{tpu_custom_call.1} parent=31 // pred_check_branch
          %221 = sbr.rel (%p219) target = $region36
        $region35: #{tpu_custom_call.1} parent=31 // pred_region
          %223 = dma.done %s215, 512
        $region36: #{tpu_custom_call.1} parent=31 // pred_fallthru
          _
        %s224 = sand.u32 %s23, 1
        %s225 = scalar_lea.sflag [#allocation6], %s224
        %s226 = sand.u32 %s57, 1
        %s227 = smul.addr %s226, 32
        %s228 = scalar_lea.vmem [#allocation5], %s227
        // Predicated region
        $region37: #{tpu_custom_call.1} parent=31 // pred_check
          %p229 = pneg %p70
        $region38: #{tpu_custom_call.1} parent=31 // pred_check_branch
          %231 = sbr.rel (%p229) target = $region40
        $region39: #{tpu_custom_call.1} parent=31 // pred_region
          %233 = dma.done %s225, 512
        $region40: #{tpu_custom_call.1} parent=31 // pred_fallthru
          _
        %s234 = sand.u32 %s23, 1
        %s235 = scalar_lea.sflag [#allocation6], %s234
        %s236 = sand.u32 %s83, 1
        %s237 = smul.addr %s236, 16
        %s238 = scalar_lea.vmem [#allocation7], %s237
        // Predicated region
        $region41: #{tpu_custom_call.1} parent=31 // pred_check
          %p239 = pneg %p96
        $region42: #{tpu_custom_call.1} parent=31 // pred_check_branch
          %241 = sbr.rel (%p239) target = $region44
        $region43: #{tpu_custom_call.1} parent=31 // pred_region
          %243 = dma.done %s235, 256
        $region44: #{tpu_custom_call.1} parent=31 // pred_fallthru
          _
        %s244 = sand.u32 %s31, 1
        %s245 = scalar_lea.sflag [#allocation3], %s244
        %s246 = sand.u32 %s31, 1
        %s247 = smul.addr %s246, 32
        %s248 = scalar_lea.vmem [#allocation2], %s247
        %p249 = pneg %p44
        %p250 = pneg %p41
        %s251 = sand.u32 %s23, 1
        %s252 = scalar_lea.sflag [#allocation6], %s251
        %s253 = sand.u32 %s57, 1
        %s254 = smul.addr %s253, 32
        %s255 = scalar_lea.vmem [#allocation5], %s254
        %p256 = pneg %p70
        %p257 = pneg %p67
        %s258 = sand.u32 %s23, 1
        %s259 = scalar_lea.sflag [#allocation6], %s258
        %s260 = sand.u32 %s83, 1
        %s261 = smul.addr %s260, 16
        %s262 = scalar_lea.vmem [#allocation7], %s261
        %p263 = pneg %p96
        %p264 = pneg %p93
        %p265 = pneg %p122
        %p266 = pneg %p119
        %s267 = sand.u32 %s109, 1
        %s268 = scalar_lea.sflag [#allocation4], %s267
        %s269 = sand.u32 %s109, 1
        %s270 = smul.addr %s269, 32
        %s271 = scalar_lea.vmem [#allocation8], %s270
        %v273 = vld [vmem:[%s218] sm:$0xff]
        %v274 = vld [vmem:[%s218 + $0x8] sm:$0xff]
        %v275 = vld [vmem:[%s218 + $0x10] sm:$0xff]
        %v276 = vld [vmem:[%s218 + $0x18] sm:$0xff]
        %v277 = vpack.c.bf16 %v274, %v273
        %v278 = vpack.c.bf16 %v276, %v275
        %v279 = vld [vmem:[%s228] sm:$0xf]
        %v280 = vld [vmem:[%s228 + $0x4] sm:$0xf]
        %v281 = vld [vmem:[%s228 + $0x8] sm:$0xf]
        %v282 = vld [vmem:[%s228 + $0xc] sm:$0xf]
        %v283 = vld [vmem:[%s228 + $0x10] sm:$0xf]
        %v284 = vld [vmem:[%s228 + $0x14] sm:$0xf]
        %v285 = vld [vmem:[%s228 + $0x18] sm:$0xf]
        %v286 = vld [vmem:[%s228 + $0x1c] sm:$0xf]
        %v295 = vunpack.c.l.b16 %v279
        %v296 = vunpack.c.l.b16 %v280
        %v297 = vunpack.c.l.b16 %v281
        %v298 = vunpack.c.l.b16 %v282
        %v299 = vunpack.c.l.b16 %v283
        %v300 = vunpack.c.l.b16 %v284
        %v301 = vunpack.c.l.b16 %v285
        %v302 = vunpack.c.l.b16 %v286
        %v303 = vpack.c.b16 %v296, %v295
        %v304 = vpack.c.b16 %v298, %v297
        %v305 = vpack.c.b16 %v300, %v299
        %v306 = vpack.c.b16 %v302, %v301
        %vm311 = vcmask 523264
        %v313 = vsel %vm311, %v277, 0
        %v316 = vsel %vm311, %v278, 0
        %318 = vmatpush.bf16.msra.mxu0 0
        %319 = vmatpush.bf16.msra.mxu0 0
        %320 = vmatpush.bf16.msra.mxu0 0
        %321 = vmatpush.bf16.msra.mxu0 0
        %322 = vmatpush.bf16.msra.mxu0 %v306
        %323 = vmatpush.bf16.msra.mxu0 %v305
        %324 = vmatpush.bf16.msra.mxu0 %v304
        %325 = vmatpush.bf16.msra.mxu0 %v303
        %326 = vmatmul.bf16.gmra.mxu0 %v313
        %v327 = vpop.f32.mrf.mxu0
        %v328 = vadd.f32 0.0, %v327
        %v329 = vpop.f32.mrf.mxu0
        %v330 = vadd.f32 0.0, %v329
        %331 = vmatmul.bf16.gmra.mxu0 %v316
        %v332 = vpop.f32.mrf.mxu0
        %v333 = vadd.f32 0.0, %v332
        %v334 = vpop.f32.mrf.mxu0
        %v335 = vadd.f32 0.0, %v334
        %336 = vdwg.mxu0
        %v337 = vld [vmem:[%s238] sm:$0xff]
        %v338 = vld [vmem:[%s238 + $0x8] sm:$0xff]
        %v339 = vadd.f32 %v328, %v337
        %v340 = vadd.f32 %v330, %v338
        %v341 = vadd.f32 %v333, %v337
        %v342 = vadd.f32 %v335, %v338
        %343 = vst [vmem:[%s271] sm:$0xff] %v339
        %344 = vst [vmem:[%s271 + $0x8] sm:$0xff] %v340
        %345 = vst [vmem:[%s271 + $0x10] sm:$0xff] %v341
        %346 = vst [vmem:[%s271 + $0x18] sm:$0xff] %v342
        %s347 = sand.u32 %s109, 1
        %s348 = scalar_lea.sflag [#allocation4], %s347
        %s349 = sand.u32 %s109, 1
        %s350 = smul.addr %s349, 32
        %s351 = scalar_lea.vmem [#allocation8], %s350
        // Predicated region
        $region45: #{tpu_custom_call.1} parent=31 // pred_check
          %p352 = pneg %p119
        $region46: #{tpu_custom_call.1} parent=31 // pred_check_branch
          %354 = sbr.rel (%p352) target = $region48
        $region47: #{tpu_custom_call.1} parent=31 // pred_region
          %356 = vsyncadd %s348, 0
          %s357 = smul.addr %s23, 4
          %s358 = smul.addr %s357, 8
          %s359 = scalar_lea.hbm %s3, %s358
          %s360 = sshll.u32 %s351, 4
          %s361 = int_to_ptr.vmem [resolvable:$true] %s360
          %s362 = sshll.u32 %s359, 4
          %s363 = int_to_ptr.hbm [resolvable:$true] %s362
          %368 = dma.vmem_to_hbm [thread:$0]  %s361, 512, %s363, %s348, 128, 128, 8
        $region48: #{tpu_custom_call.1} parent=31 // pred_fallthru
          _
      $region32: #{tpu_custom_call.1} parent=5 // pred_fallthru
        _
      %p369 = scmp.le.s32.totalorder 2, %s18
      // Predicated region
      $region49: #{tpu_custom_call.1} parent=5 // pred_check
        %p370 = pneg %p369
      $region50: #{tpu_custom_call.1} parent=5 // pred_check_branch
        %372 = sbr.rel (%p370) target = $region52
      $region51: #{tpu_custom_call.1} parent=5 // pred_region
        %s373 = ssub.s32 %s18, 2
        // Predicated region
        $region53: #{tpu_custom_call.1} parent=51 // pred_check
          %p374 = pneg %p125
        $region54: #{tpu_custom_call.1} parent=51 // pred_check_branch
          %376 = sbr.rel (%p374) target = $region56
        $region55: #{tpu_custom_call.1} parent=51 // pred_region
          %s377 = sand.u32 %s110, 1
          %s378 = scalar_lea.sflag [#allocation4], %s377
          %s379 = sand.u32 %s110, 1
          %s380 = smul.addr %s379, 32
          %s381 = scalar_lea.vmem [#allocation8], %s380
          %383 = dma.done %s378, 512
        $region56: #{tpu_custom_call.1} parent=51 // pred_fallthru
          _
      $region52: #{tpu_custom_call.1} parent=5 // pred_fallthru
        _
    $region6: #{tpu_custom_call.1} parent=1 // loop_footer
      %s22 = sadd.s32 1, %s18
    $region7: #{tpu_custom_call.1} parent=1 // loop_footer_branch
      %17 = sbr.rel target = $region3
    $region8: #{tpu_custom_call.1} parent=1 // loop_exit
      _
    %384 = vsyncpa [#allocation3], 1
    %s385 = scalar_lea.sflag [#allocation3], 1
    %386 = vsyncpa %s385, 1
    %387 = vsyncpa [#allocation6], 1
    %s388 = scalar_lea.sflag [#allocation6], 1
    %389 = vsyncpa %s388, 1
    %390 = vsyncpa [#allocation4], 1
    %s391 = scalar_lea.sflag [#allocation4], 1
    %392 = vsyncpa %s391, 1

</llo_original>
